<compile_context>
chip_gen: v5e
topology: v5e:2x2
jax: 0.10.0
libtpu: 0.0.40
codegen_flags: <defaults>
</compile_context>

<pallas_src>
import functools
import math

import numpy as np
import jax
import jax.numpy as jnp
from jax import lax
from jax.experimental import pallas as pl
from jax.experimental.pallas import tpu as pltpu


# ---------------------------------------------------------------------------
# dilate / undilate in channel-last (N, L, C) layout (same index mapping as the
# PyTorch NCL version, just without the per-layer channel transposes).
# ---------------------------------------------------------------------------
def dilate_nlc(x, dilation, left_pad=True):
    """(N, L, C) -> (N*dilation, ceil(L/dilation), C), returns (x, pad)."""
    if dilation == 1:
        return x, 0
    N, L, C = x.shape
    new_L = int(math.ceil(L / dilation) * dilation)
    pad = new_L - L
    if pad:
        if left_pad:
            x = jnp.pad(x, ((0, 0), (pad, 0), (0, 0)))
        else:
            x = jnp.pad(x, ((0, 0), (0, pad), (0, 0)))
    L = new_L
    Lp, Np = L // dilation, N * dilation
    x = jnp.transpose(x, (1, 0, 2)).reshape(Lp, Np, C)
    return jnp.transpose(x, (1, 0, 2)), pad


def undilate_nlc(x, dilation, left_unpad, symm_unpad):
    """(N*dilation, Lq, C) -> (N, Lq*dilation - left_unpad - 2*symm_unpad, C)."""
    Np, Lq, C = x.shape
    N = Np // dilation
    L = Lq * dilation
    x = jnp.transpose(x, (1, 0, 2)).reshape(L, N, C)
    x = jnp.transpose(x, (1, 0, 2))
    new_L = L - left_unpad - 2 * symm_unpad
    start = left_unpad + symm_unpad
    return x[:, start:start + new_L, :]


# ---------------------------------------------------------------------------
# Pallas kernel
# ---------------------------------------------------------------------------
def _shift_rows_down(a, s):
    """result[i] = a[i - s] (wrapped rows land only in the discarded first K-1
    rows of each Lp group).  Kept as slice+concat: pltpu.roll on the sublane
    axis of a packed bf16 tile is not a reliably supported Mosaic lowering."""
    if s == 0:
        return a
    return jnp.concatenate([a[-s:, :], a[:-s, :]], axis=0)


def _residual_block_kernel(x_ref, c_ref, w1_ref, b1_ref, w2_ref, b2_ref, o_ref,
                           *, K, D):
    # x_ref:  (R, Cin)   bf16        c_ref:  (R, Ccond) bf16
    # w1_ref: (K*Cin+Ccond, 2D) bf16  b1_ref: (1, 2D)   f32
    # w2_ref: (D+Cres, Cres+Cskip) bf16 (last Cres rows are [I | 0])
    # b2_ref: (1, Cres+Cskip) f32    o_ref:  (R, Cres+Cskip) bf16
    # Rows are B_TILE groups of Lp; the FIRST K-1 rows of each group are junk
    # and are dropped by the wrapper.
    x = x_ref[...]
    c = c_ref[...]

    # Causal taps: kernel position k sees x[p - (K-1-k)]; tap K-1 is x itself,
    # so the conditioning input and the residual tap need no shift.
    taps = [_shift_rows_down(x, K - 1 - k) for k in range(K - 1)] + [x]
    xin = jnp.concatenate(taps + [c], axis=-1)           # (R, K*Cin+Ccond) bf16

    acc = jnp.dot(xin, w1_ref[...], preferred_element_type=jnp.float32)
    acc = acc + b1_ref[...]                              # f32, broadcast bias

    # gated activation in f32 (v5e VPU/EUP have no bf16 path)
    gated = jnp.tanh(acc[:, :D]) * jax.nn.sigmoid(acc[:, D:])

    # [gated | x] @ [[w_res | w_skip], [I | 0]] : residual add fused into the
    # matmul (bf16 identity * bf16 x is exact; MXU accumulates in f32).
    gin = jnp.concatenate([gated.astype(x.dtype), x], axis=-1)   # (R, D+Cres)
    out = jnp.dot(gin, w2_ref[...], preferred_element_type=jnp.float32)

    o_ref[...] = (out + b2_ref[...]).astype(o_ref.dtype)         # bf16 store


# ---------------------------------------------------------------------------
# Tile sizing / VMEM budgeting
# ---------------------------------------------------------------------------
def _vmem_capacity_bytes():
    """Physical VMEM per TensorCore (128 MiB v5e/v6e, 64 MiB v7x)."""
    try:
        return int(pltpu.get_tpu_info().vmem_capacity_bytes)
    except Exception:
        return 64 * 1024 * 1024          # conservative default (v7x-sized)


def _per_row_vmem_bytes(Cin, Ccond, K, D, Ctot):
    """VMEM bytes per flattened row in one grid step (pipeline + in-kernel)."""
    io = 2 * 2 * (Cin + Ccond + Ctot)       # double-buffered bf16 in/out blocks
    taps = (K - 1) * 2 * Cin                # shifted causal-tap copies (bf16)
    xin = 2 * (K * Cin + Ccond)             # fused first-matmul input (bf16)
    acc = 3 * 4 * 2 * D                     # f32 pre-activation + tanh/sig temps
    gate = 4 * D + 2 * D                    # f32 gated + bf16 cast
    gin = 2 * (D + Cin)                     # [gated | x] second-matmul input
    outb = 4 * Ctot + 2 * Ctot              # f32 matmul result + bf16 store value
    return io + taps + xin + acc + gate + gin + outb


def _vmem_limit_bytes(step_bytes, weight_bytes, vmem_cap):
    """Request a limit sized from the actual per-step footprint (+ headroom)."""
    need = int(step_bytes) + int(weight_bytes) + (8 << 20)
    return int(min(max(need, 16 << 20), vmem_cap - (8 << 20)))


def _pick_b_tile(Np, Lp, per_row_bytes, vmem_cap):
    """Dilated batch elements per grid step."""
    # Flattened (B_TILE*Lp, C) blocks: keep the sublane extent a multiple of the
    # packed sublane tile (16 rows covers bf16 inputs and bf16/f32 outputs).
    sub = 16
    g = sub // math.gcd(Lp, sub)

    budget = max(int(vmem_cap) // 2, 4 << 20)
    b_cap = max(1, budget // max(per_row_bytes * Lp, 1))

    b = min(max(1, -(-2048 // Lp)), b_cap)       # target ~2K rows per matmul
    # >= 4 grid steps (>= 2 per v7x TensorCore) when tiles stay >= 512 rows,
    # so DMA-in / writeback overlap with compute on every core.
    quarter = Np // 4
    if quarter * Lp >= 512:
        b = min(b, quarter)
    b = max(g, (b // g) * g)                     # honor sublane divisibility
    b = min(b, max(g, -(-Np // g) * g))          # no padding beyond one tile
    return int(b)


# ---------------------------------------------------------------------------
# Channel-last forward (use this directly when stacking layers; returns bf16).
# ---------------------------------------------------------------------------
def residual_block_nlc(x, condition, params, *, dilation, kernel_size, padding=0):
    """x: (N, L, Cin), condition: (N, L, Ccond) -> (res (N, L', Cres),
    skip (N, L', Cskip)), channel-last, bf16."""
    assert padding == 0, "kernel implemented for padding=0 (module default)"
    K = kernel_size

    xd, left_pad = dilate_nlc(x.astype(jnp.bfloat16), dilation)
    cd, _ = dilate_nlc(condition.astype(jnp.bfloat16), dilation)
    Np, Lp, Cin = xd.shape
    Ccond = cd.shape[-1]
    assert Lp >= K, "sequence too short for this dilation / kernel size"
    Lout = Lp - K + 1

    D = params['w_conv'].shape[0] // 2
    Cres = params['w_res'].shape[0]
    Cskip = params['w_skip'].shape[0]
    Ctot = Cres + Cskip
    assert Cin == Cres, "residual add requires in_channels == residual_channels"
    Kin = K * Cin + Ccond

    # ---- fused weights: [tap0 .. tapK-1 | cond] and [[res | skip], [I | 0]] --
    wconv = jnp.transpose(params['w_conv'], (2, 1, 0))                 # (K, Cin, 2D)
    w1 = jnp.concatenate([wconv[k] for k in range(K)]
                         + [jnp.transpose(params['w_cond'][:, :, 0])],
                         axis=0).astype(jnp.bfloat16)                  # (Kin, 2D)
    b1 = (params['b_conv'] + params['b_cond']).reshape(1, 2 * D).astype(jnp.float32)

    w_rs = jnp.concatenate([jnp.transpose(params['w_res'][:, :, 0]),
                            jnp.transpose(params['w_skip'][:, :, 0])],
                           axis=1)                                     # (D, Ctot)
    w_id = jnp.concatenate([jnp.eye(Cres, dtype=w_rs.dtype),
                            jnp.zeros((Cres, Cskip), w_rs.dtype)], axis=1)
    w2 = jnp.concatenate([w_rs, w_id], axis=0).astype(jnp.bfloat16)    # (D+Cres, Ctot)
    b2 = jnp.concatenate([params['b_res'], params['b_skip']]
                         ).reshape(1, Ctot).astype(jnp.float32)

    # ---- tile sizing ----------------------------------------------------------
    vmem_cap = _vmem_capacity_bytes()
    per_row = _per_row_vmem_bytes(Cin, Ccond, K, D, Ctot)
    B_TILE = _pick_b_tile(Np, Lp, per_row, vmem_cap)
    Np_pad = -(-Np // B_TILE) * B_TILE
    if Np_pad != Np:
        xd = jnp.pad(xd, ((0, Np_pad - Np), (0, 0), (0, 0)))
        cd = jnp.pad(cd, ((0, Np_pad - Np), (0, 0), (0, 0)))

    weight_bytes = 2 * int(w1.size * 2 + w2.size * 2 + b1.size * 4 + b2.size * 4)
    vmem_limit = _vmem_limit_bytes(B_TILE * Lp * per_row, weight_bytes, vmem_cap)

    # flatten to 2-D rows (free: collapses leading contiguous dims)
    xr = xd.reshape(Np_pad * Lp, Cin)
    cr = cd.reshape(Np_pad * Lp, Ccond)
    R_TILE = B_TILE * Lp

    kernel = functools.partial(_residual_block_kernel, K=K, D=D)

    out = pl.pallas_call(
        kernel,
        out_shape=jax.ShapeDtypeStruct((Np_pad * Lp, Ctot), jnp.bfloat16),
        grid=(Np_pad // B_TILE,),
        in_specs=[
            pl.BlockSpec((R_TILE, Cin), lambda i: (i, 0)),
            pl.BlockSpec((R_TILE, Ccond), lambda i: (i, 0)),
            pl.BlockSpec((Kin, 2 * D), lambda i: (0, 0)),
            pl.BlockSpec((1, 2 * D), lambda i: (0, 0)),
            pl.BlockSpec((D + Cres, Ctot), lambda i: (0, 0)),
            pl.BlockSpec((1, Ctot), lambda i: (0, 0)),
        ],
        out_specs=pl.BlockSpec((R_TILE, Ctot), lambda i: (i, 0)),
        compiler_params=pltpu.CompilerParams(
            dimension_semantics=("parallel",),
            vmem_limit_bytes=vmem_limit),
    )(xr, cr, w1, b1, w2, b2)

    # drop padded batch elements and the K-1 junk rows at the START of each
    # group (causal formulation), then one bf16 undilate over the fused tensor.
    out = out.reshape(Np_pad, Lp, Ctot)[:Np, K - 1:, :]        # (Np, Lout, Ctot)
    und = undilate_nlc(out, dilation, left_pad, padding)
    # TODO(synk): when stacking layers with doubling dilation, skip this
    # undilate and re-dilate the (Np, Lout, Ctot) tensor by 2 directly.
    return und[..., :Cres], und[..., Cres:]


# ---------------------------------------------------------------------------
# PyTorch-layout (N, C, L) wrapper — transposes / f32 only at the model boundary.
# ---------------------------------------------------------------------------
def dilated_queue_residual_block(x, condition, params, *, dilation,
                                 kernel_size, padding=0):
    res, skip = residual_block_nlc(
        jnp.transpose(x, (0, 2, 1)), jnp.transpose(condition, (0, 2, 1)),
        params, dilation=dilation, kernel_size=kernel_size, padding=padding)
    return (jnp.transpose(res, (0, 2, 1)).astype(jnp.float32),
            jnp.transpose(skip, (0, 2, 1)).astype(jnp.float32))


# ---------------------------------------------------------------------------
# Pure-JAX reference (NCL, direct port of the PyTorch forward) for validation
# ---------------------------------------------------------------------------
def _ref_dilate(x, dilation, left_pad=True):
    if dilation == 1:
        return x, 0
    N, C, L = x.shape
    new_L = int(math.ceil(L / dilation) * dilation)
    pad = new_L - L
    if pad:
        x = jnp.pad(x, ((0, 0), (0, 0), (pad, 0) if left_pad else (0, pad)))
    L = new_L
    Lp, Np = L // dilation, N * dilation
    x = jnp.transpose(x, (1, 2, 0)).reshape(C, Lp, Np)
    return jnp.transpose(x, (2, 0, 1)), pad


def _ref_undilate(x, dilation, left_unpad, symm_unpad):
    Np, C, Lp = x.shape
    N = Np // dilation
    L = Lp * dilation
    x = jnp.transpose(x, (1, 2, 0)).reshape(C, L, N)
    x = jnp.transpose(x, (2, 0, 1))
    new_L = L - left_unpad - 2 * symm_unpad
    start = left_unpad + symm_unpad
    return x[:, :, start:start + new_L]


def ref_forward(x, condition, p, *, dilation, kernel_size, padding=0):
    K = kernel_size
    xd, left_pad = _ref_dilate(x, dilation)
    cd, _ = _ref_dilate(condition, dilation)
    D = p['w_conv'].shape[0] // 2

    conv = lax.conv_general_dilated(
        xd, p['w_conv'], window_strides=(1,), padding='VALID',
        dimension_numbers=('NCH', 'OIH', 'NCH'))
    conv = conv + p['b_conv'][None, :, None]
    f, g = conv[:, :D, :], conv[:, D:, :]
    Lout = f.shape[2]

    cn = cd[:, :, cd.shape[2] - Lout:]
    cconv = jnp.einsum('ncl,oc->nol', cn, p['w_cond'][:, :, 0]) \
        + p['b_cond'][None, :, None]
    f = f + cconv[:, :D, :]
    g = g + cconv[:, D:, :]
    out = jnp.tanh(f) * jax.nn.sigmoid(g)

    res = jnp.einsum('ncl,oc->nol', out, p['w_res'][:, :, 0]) \
        + p['b_res'][None, :, None]
    skip = jnp.einsum('ncl,oc->nol', out, p['w_skip'][:, :, 0]) \
        + p['b_skip'][None, :, None]
    outr = xd[:, :, xd.shape[2] - Lout:] + res

    outr = _ref_undilate(outr, dilation, left_pad, padding)
    skip = _ref_undilate(skip, dilation, left_pad, padding)
    return outr, skip


# ---------------------------------------------------------------------------
if __name__ == "__main__":
    N, L = 2, 16
    in_channels = residual_channels = 32
    cond_channels = 16
    dilation_channels = 32
    skip_channels = 32
    kernel_size = 2
    dilation = 2

    key = jax.random.PRNGKey(0)
    keys = jax.random.split(key, 10)

    def uinit(k, shape, fan_in):
        b = 1.0 / math.sqrt(fan_in)
        return jax.random.uniform(k, shape, jnp.float32, -b, b)

    params = {
        'w_conv': uinit(keys[0], (2 * dilation_channels, in_channels, kernel_size),
                        in_channels * kernel_size),
        'b_conv': uinit(keys[1], (2 * dilation_channels,), in_channels * kernel_size),
        'w_cond': uinit(keys[2], (2 * dilation_channels, cond_channels, 1),
                        cond_channels),
        'b_cond': uinit(keys[3], (2 * dilation_channels,), cond_channels),
        'w_res': uinit(keys[4], (residual_channels, dilation_channels, 1),
                       dilation_channels),
        'b_res': uinit(keys[5], (residual_channels,), dilation_channels),
        'w_skip': uinit(keys[6], (skip_channels, dilation_channels, 1),
                        dilation_channels),
        'b_skip': uinit(keys[7], (skip_channels,), dilation_channels),
    }

    x = jax.random.normal(keys[8], (N, in_channels, L), jnp.float32)
    cond = jax.random.normal(keys[9], (N, cond_channels, L), jnp.float32)

    out, skip = dilated_queue_residual_block(
        x, cond, params, dilation=dilation, kernel_size=kernel_size, padding=0)
    jax.block_until_ready((out, skip))

    out_ref, skip_ref = ref_forward(
        x, cond, params, dilation=dilation, kernel_size=kernel_size, padding=0)
    assert out.shape == out_ref.shape and skip.shape == skip_ref.shape
    # bf16 matmul inputs/weights/output (f32 accumulation) vs. full-f32 reference.
    assert np.allclose(np.asarray(out), np.asarray(out_ref), atol=5e-2, rtol=5e-2)
    assert np.allclose(np.asarray(skip), np.asarray(skip_ref), atol=5e-2, rtol=5e-2)

    # TODO(synk): ConvolutionQueue / generate() is a stateful Python deque used
    # only for autoregressive sampling, not part of forward(); not translated.
    print("KERNEL_OK")
</pallas_src>

<mosaic_0001>
module attributes {stable_mosaic.version = 11 : i64} {
  func.func @_residual_block_kernel(%arg0: i32, %arg1: memref<32x32xbf16, #tpu.memory_space<vmem>>, %arg2: memref<32x16xbf16, #tpu.memory_space<vmem>>, %arg3: memref<80x64xbf16, #tpu.memory_space<vmem>>, %arg4: memref<1x64xf32, #tpu.memory_space<vmem>>, %arg5: memref<64x64xbf16, #tpu.memory_space<vmem>>, %arg6: memref<1x64xf32, #tpu.memory_space<vmem>>, %arg7: memref<32x64xbf16, #tpu.memory_space<vmem>>) attributes {dimension_semantics = [#tpu.dimension_semantics<parallel>], iteration_bounds = array<i64: 1>, scalar_prefetch = 0 : i64, scratch_operands = 0 : i64, tpu.core_type = #tpu.core_type<tc>, window_params = [{transform_indices = @transform_0, window_bounds = array<i64: 32, 32>}, {transform_indices = @transform_1, window_bounds = array<i64: 32, 16>}, {pipeline_mode = #tpu.pipeline_mode<synchronous>, transform_indices = @transform_2, window_bounds = array<i64: 80, 64>}, {pipeline_mode = #tpu.pipeline_mode<synchronous>, transform_indices = @transform_3, window_bounds = array<i64: 1, 64>}, {pipeline_mode = #tpu.pipeline_mode<synchronous>, transform_indices = @transform_4, window_bounds = array<i64: 64, 64>}, {pipeline_mode = #tpu.pipeline_mode<synchronous>, transform_indices = @transform_5, window_bounds = array<i64: 1, 64>}, {transform_indices = @transform_6, window_bounds = array<i64: 32, 64>}]} {
    %c0 = arith.constant 0 : index
    %c0_0 = arith.constant 0 : index
    %0 = vector.load %arg1[%c0, %c0_0] : memref<32x32xbf16, #tpu.memory_space<vmem>>, vector<32x32xbf16>
    %c0_1 = arith.constant 0 : index
    %c0_2 = arith.constant 0 : index
    %1 = vector.load %arg2[%c0_1, %c0_2] : memref<32x16xbf16, #tpu.memory_space<vmem>>, vector<32x16xbf16>
    %2 = vector.extract_strided_slice %0 {offsets = [31, 0], sizes = [1, 32], strides = [1, 1]} : vector<32x32xbf16> to vector<1x32xbf16>
    %3 = vector.extract_strided_slice %0 {offsets = [0, 0], sizes = [31, 32], strides = [1, 1]} : vector<32x32xbf16> to vector<31x32xbf16>
    %4 = tpu.concatenate %2, %3 in 0 : vector<1x32xbf16>, vector<31x32xbf16> -> vector<32x32xbf16>
    %5 = tpu.concatenate %4, %0, %1 in 1 : vector<32x32xbf16>, vector<32x32xbf16>, vector<32x16xbf16> -> vector<32x80xbf16>
    %c0_3 = arith.constant 0 : index
    %c0_4 = arith.constant 0 : index
    %6 = vector.load %arg3[%c0_3, %c0_4] : memref<80x64xbf16, #tpu.memory_space<vmem>>, vector<80x64xbf16>
    %cst = arith.constant dense<0.000000e+00> : vector<32x64xf32>
    %7 = tpu.matmul %5, %6, %cst {dimension_numbers = #tpu.dot_dimension_numbers<[1], [0], [0], [1], [0, 0, 1, 1], [], []>} : vector<32x80xbf16>, vector<80x64xbf16>, vector<32x64xf32> -> vector<32x64xf32>
    %c0_5 = arith.constant 0 : index
    %c0_6 = arith.constant 0 : index
    %8 = vector.load %arg4[%c0_5, %c0_6] : memref<1x64xf32, #tpu.memory_space<vmem>>, vector<1x64xf32>
    %9 = vector.broadcast %8 : vector<1x64xf32> to vector<32x64xf32>
    %10 = arith.addf %7, %9 : vector<32x64xf32>
    %11 = vector.extract_strided_slice %10 {offsets = [0, 0], sizes = [32, 32], strides = [1, 1]} : vector<32x64xf32> to vector<32x32xf32>
    %12 = math.tanh %11 : vector<32x32xf32>
    %13 = vector.extract_strided_slice %10 {offsets = [0, 32], sizes = [32, 32], strides = [1, 1]} : vector<32x64xf32> to vector<32x32xf32>
    %14 = arith.negf %13 : vector<32x32xf32>
    %15 = math.exp %14 : vector<32x32xf32>
    %cst_7 = arith.constant 1.000000e+00 : f32
    %16 = vector.broadcast %cst_7 : f32 to vector<32x32xf32>
    %17 = arith.addf %16, %15 : vector<32x32xf32>
    %18 = arith.divf %16, %17 : vector<32x32xf32>
    %19 = arith.mulf %12, %18 : vector<32x32xf32>
    %20 = arith.truncf %19 : vector<32x32xf32> to vector<32x32xbf16>
    %21 = tpu.concatenate %20, %0 in 1 : vector<32x32xbf16>, vector<32x32xbf16> -> vector<32x64xbf16>
    %c0_8 = arith.constant 0 : index
    %c0_9 = arith.constant 0 : index
    %22 = vector.load %arg5[%c0_8, %c0_9] : memref<64x64xbf16, #tpu.memory_space<vmem>>, vector<64x64xbf16>
    %cst_10 = arith.constant dense<0.000000e+00> : vector<32x64xf32>
    %23 = tpu.matmul %21, %22, %cst_10 {dimension_numbers = #tpu.dot_dimension_numbers<[1], [0], [0], [1], [0, 0, 1, 1], [], []>} : vector<32x64xbf16>, vector<64x64xbf16>, vector<32x64xf32> -> vector<32x64xf32>
    %c0_11 = arith.constant 0 : index
    %c0_12 = arith.constant 0 : index
    %24 = vector.load %arg6[%c0_11, %c0_12] : memref<1x64xf32, #tpu.memory_space<vmem>>, vector<1x64xf32>
    %25 = vector.broadcast %24 : vector<1x64xf32> to vector<32x64xf32>
    %26 = arith.addf %23, %25 : vector<32x64xf32>
    %27 = arith.truncf %26 : vector<32x64xf32> to vector<32x64xbf16>
    %c0_13 = arith.constant 0 : index
    %c0_14 = arith.constant 0 : index
    %28 = vector.load %arg7[%c0_13, %c0_14] : memref<32x64xbf16, #tpu.memory_space<vmem>>, vector<32x64xbf16>
    tpu.vector_store %arg7[%c0_13, %c0_14], %27 {strides = array<i32>} : memref<32x64xbf16, #tpu.memory_space<vmem>>, vector<32x64xbf16>,
    return
  }
  func.func @transform_0(%arg0: i32) -> (i32, i32) {
    %c0_i32 = arith.constant 0 : i32
    %c0_i32_0 = arith.constant 0 : i32
    return %arg0, %c0_i32 : i32, i32
  }
  func.func @transform_1(%arg0: i32) -> (i32, i32) {
    %c0_i32 = arith.constant 0 : i32
    %c0_i32_0 = arith.constant 0 : i32
    return %arg0, %c0_i32 : i32, i32
  }
  func.func @transform_2(%arg0: i32) -> (i32, i32) {
    %c0_i32 = arith.constant 0 : i32
    %c0_i32_0 = arith.constant 0 : i32
    %c0_i32_1 = arith.constant 0 : i32
    return %c0_i32, %c0_i32_0 : i32, i32
  }
  func.func @transform_3(%arg0: i32) -> (i32, i32) {
    %c0_i32 = arith.constant 0 : i32
    %c0_i32_0 = arith.constant 0 : i32
    %c0_i32_1 = arith.constant 0 : i32
    return %c0_i32, %c0_i32_0 : i32, i32
  }
  func.func @transform_4(%arg0: i32) -> (i32, i32) {
    %c0_i32 = arith.constant 0 : i32
    %c0_i32_0 = arith.constant 0 : i32
    %c0_i32_1 = arith.constant 0 : i32
    return %c0_i32, %c0_i32_0 : i32, i32
  }
  func.func @transform_5(%arg0: i32) -> (i32, i32) {
    %c0_i32 = arith.constant 0 : i32
    %c0_i32_0 = arith.constant 0 : i32
    %c0_i32_1 = arith.constant 0 : i32
    return %c0_i32, %c0_i32_0 : i32, i32
  }
  func.func @transform_6(%arg0: i32) -> (i32, i32) {
    %c0_i32 = arith.constant 0 : i32
    %c0_i32_0 = arith.constant 0 : i32
    return %arg0, %c0_i32 : i32, i32
  }
}

</mosaic_0001>

<llo_original>
// kernel: tpu_custom_call.1
$region0: #{tpu_custom_call.1}
  #allocation0 [shape = 'u32[]', space=smem, size = 0x4, offset = 0x4, fixed_abs, tag = 'smem constant byte address 0x4 - core index']
  #allocation1 [shape = 'u32[72,128]{1,0:T(1,128)}', space=vmem, size = 0x9000, scoped, tag = 'internal scratch']
  %s0 = inlined_call_operand.vmem [shape: bf16[32,32], index: 0, kind: input, shape index: {}]
  %s1 = inlined_call_operand.vmem [shape: bf16[32,16], index: 1, kind: input, shape index: {}]
  %s2 = inlined_call_operand.vmem [shape: bf16[80,64], index: 2, kind: input, shape index: {}]
  %s3 = inlined_call_operand.vmem [shape: f32[1,64], index: 3, kind: input, shape index: {}]
  %s4 = inlined_call_operand.vmem [shape: bf16[64,64], index: 4, kind: input, shape index: {}]
  %s5 = inlined_call_operand.vmem [shape: f32[1,64], index: 5, kind: input, shape index: {}]
  %s6 = inlined_call_operand.hbm [shape: bf16[32,64], index: 6, kind: output, shape index: {}]
  %s7 = sld [smem:[#allocation0]]
  $region34: #{tpu_custom_call.1} parent=0
    _
  %s9 = ssub.s32 1, %s7
  %s10 = scalar_select 0, %s9, %s7
  $region1: #{tpu_custom_call.1} parent=0
    #allocation2 [shape = 'u8[8192]{0}', space=vmem, size = 0x2000, scoped, tag = 'output window, operand 0, single buffered']
    #allocation3 [shape = 's32[1]{0}', space=sflag, size = 0x4, scoped, tag = 'scoped memory for tpu_custom_call.1']
    %11 = vsyncpa [#allocation3], 0
    // Predicated region
    $region2: #{tpu_custom_call.1} parent=1 // pred_check
      _
    $region3: #{tpu_custom_call.1} parent=1 // pred_check_branch
      %13 = sbr.rel (0) target = $region5
    $region4: #{tpu_custom_call.1} parent=1 // pred_region
      _
    $region5: #{tpu_custom_call.1} parent=1 // pred_fallthru
      _
    // Predicated region
    $region6: #{tpu_custom_call.1} parent=1 // pred_check
      _
    $region7: #{tpu_custom_call.1} parent=1 // pred_check_branch
      %15 = sbr.rel (0) target = $region9
    $region8: #{tpu_custom_call.1} parent=1 // pred_region
      _
    $region9: #{tpu_custom_call.1} parent=1 // pred_fallthru
      _
    // Predicated region
    $region10: #{tpu_custom_call.1} parent=1 // pred_check
      _
    $region11: #{tpu_custom_call.1} parent=1 // pred_check_branch
      %17 = sbr.rel (0) target = $region13
    $region12: #{tpu_custom_call.1} parent=1 // pred_region
      _
    $region13: #{tpu_custom_call.1} parent=1 // pred_fallthru
      _
    // Predicated region
    $region14: #{tpu_custom_call.1} parent=1 // pred_check
      _
    $region15: #{tpu_custom_call.1} parent=1 // pred_check_branch
      %19 = sbr.rel (0) target = $region17
    $region16: #{tpu_custom_call.1} parent=1 // pred_region
      _
    $region17: #{tpu_custom_call.1} parent=1 // pred_fallthru
      _
    // Predicated region
    $region18: #{tpu_custom_call.1} parent=1 // pred_check
      _
    $region19: #{tpu_custom_call.1} parent=1 // pred_check_branch
      %21 = sbr.rel (0) target = $region21
    $region20: #{tpu_custom_call.1} parent=1 // pred_region
      _
    $region21: #{tpu_custom_call.1} parent=1 // pred_fallthru
      _
    // Predicated region
    $region22: #{tpu_custom_call.1} parent=1 // pred_check
      _
    $region23: #{tpu_custom_call.1} parent=1 // pred_check_branch
      %23 = sbr.rel (0) target = $region25
    $region24: #{tpu_custom_call.1} parent=1 // pred_region
      _
    $region25: #{tpu_custom_call.1} parent=1 // pred_fallthru
      _
    %v25 = vld [vmem:[%s0] sm:$0xf]
    %v26 = vld [vmem:[%s0 + $0x4] sm:$0xf]
    %v27 = vld [vmem:[%s0 + $0x8] sm:$0xf]
    %v28 = vld [vmem:[%s0 + $0xc] sm:$0xf]
    %v29 = vld [vmem:[%s1] sm:$0xf]
    %v30 = vld [vmem:[%s1 + $0x4] sm:$0xf]
    %v31 = vld [vmem:[%s1 + $0x8] sm:$0xf]
    %v32 = vld [vmem:[%s1 + $0xc] sm:$0xf]
    %v34 = vunpack.c.l.b16 %v28
    %v35 = vpack.c.b16 %v34, %v34
    %v37 = vshrl.u32 %v35, 16
    %v39 = vrot.slane %v37, 3
    %v44 = vunpack.c.l.b16 %v25
    %v45 = vunpack.c.l.b16 %v26
    %v46 = vunpack.c.l.b16 %v27
    %v47 = vpack.c.b16 %v45, %v44
    %v48 = vpack.c.b16 %v34, %v46
    %vm49 = vsmask.f32 256
    %v51 = vshrl.u32 %v47, 16
    %v53 = vrot.slane %v51, 7
    %v54 = vshll.u32 %v47, 16
    %v56 = vor.u32 %v53, %v54
    %v58 = vshrl.u32 %v48, 16
    %v60 = vrot.slane %v58, 7
    %v61 = vshll.u32 %v48, 16
    %v63 = vor.u32 %v60, %v61
    %v64 = vsel %vm49, %v53, %v63
    %vm66 = vcmask 1040384
    %vm67 = vmand %vm66, %vm49
    %v68 = vsel %vm67, %v39, %v56
    %69 = vrot.lane.b32.xlu0 %v47, 32
    %v70 = vpop.permute.xlu0 %69
    %71 = vrot.lane.b32.xlu0 %v48, 32
    %v72 = vpop.permute.xlu0 %71
    %v77 = vunpack.c.l.b16 %v29
    %v78 = vunpack.c.l.b16 %v30
    %v79 = vunpack.c.l.b16 %v31
    %v80 = vunpack.c.l.b16 %v32
    %v81 = vpack.c.b16 %v78, %v77
    %v82 = vpack.c.b16 %v80, %v79
    %83 = vrot.lane.b32.xlu0 %v81, 64
    %v84 = vpop.permute.xlu0 %83
    %85 = vrot.lane.b32.xlu0 %v82, 64
    %v86 = vpop.permute.xlu0 %85
    %vm87 = vcmask 261120
    %v90 = vsel %vm87, %v68, %v70
    %v93 = vsel %vm87, %v64, %v72
    %vm94 = vcmask 523264
    %v96 = vsel %vm94, %v90, %v84
    %v98 = vsel %vm94, %v93, %v86
    %v99 = vld [vmem:[%s2] sm:$0xf]
    %v100 = vld [vmem:[%s2 + $0x4] sm:$0xf]
    %v101 = vld [vmem:[%s2 + $0x8] sm:$0xf]
    %v102 = vld [vmem:[%s2 + $0xc] sm:$0xf]
    %v103 = vld [vmem:[%s2 + $0x10] sm:$0xf]
    %v104 = vld [vmem:[%s2 + $0x14] sm:$0xf]
    %v105 = vld [vmem:[%s2 + $0x18] sm:$0xf]
    %v106 = vld [vmem:[%s2 + $0x1c] sm:$0xf]
    %v107 = vld [vmem:[%s2 + $0x20] sm:$0xf]
    %v108 = vld [vmem:[%s2 + $0x24] sm:$0xf]
    %v109 = vld [vmem:[%s3] sm:$0x1]
    %v111 = vperm.slane %v109, 0
    %v123 = vunpack.c.l.b16 %v99
    %v124 = vunpack.c.l.b16 %v100
    %v125 = vunpack.c.l.b16 %v101
    %v126 = vunpack.c.l.b16 %v102
    %v127 = vunpack.c.l.b16 %v103
    %v128 = vunpack.c.l.b16 %v104
    %v129 = vunpack.c.l.b16 %v105
    %v130 = vunpack.c.l.b16 %v106
    %v131 = vunpack.c.l.b16 %v107
    %v132 = vunpack.c.l.b16 %v108
    %v133 = vpack.c.b16 %v124, %v123
    %v134 = vpack.c.b16 %v126, %v125
    %v135 = vpack.c.b16 %v128, %v127
    %v136 = vpack.c.b16 %v130, %v129
    %v137 = vpack.c.b16 %v132, %v131
    %vm143 = vcmask 654336
    %v144 = vsel %vm143, %v96, 0
    %v146 = vsel %vm143, %v98, 0
    %148 = vmatpush.bf16.msra.mxu0 0
    %149 = vmatpush.bf16.msra.mxu0 0
    %150 = vmatpush.bf16.msra.mxu0 0
    %151 = vmatpush.bf16.msra.mxu0 %v137
    %152 = vmatpush.bf16.msra.mxu0 %v136
    %153 = vmatpush.bf16.msra.mxu0 %v135
    %154 = vmatpush.bf16.msra.mxu0 %v134
    %155 = vmatpush.bf16.msra.mxu0 %v133
    %156 = vmatmul.bf16.gmra.mxu0 %v144
    %v157 = vpop.f32.mrf.mxu0
    %v158 = vadd.f32 %v111, %v157
    %v159 = vpop.f32.mrf.mxu0
    %v160 = vadd.f32 %v111, %v159
    %161 = vmatmul.bf16.gmra.mxu0 %v146
    %v162 = vpop.f32.mrf.mxu0
    %v163 = vadd.f32 %v111, %v162
    %v164 = vpop.f32.mrf.mxu0
    %v165 = vadd.f32 %v111, %v164
    %166 = vdwg.mxu0
    %v167 = vtanh.pop %v158
    %v168 = vtanh.pop %v160
    %v169 = vtanh.pop %v163
    %v170 = vtanh.pop %v165
    %v171 = vxor.u32 %v158, 2147483648
    %v172 = vxor.u32 %v160, 2147483648
    %v173 = vxor.u32 %v163, 2147483648
    %v174 = vxor.u32 %v165, 2147483648
    %v175 = vmul.f32 %v171, 1.442695
    %v176 = vpow.pop %v175
    %v177 = vmul.f32 %v172, 1.442695
    %v178 = vpow.pop %v177
    %v179 = vmul.f32 %v173, 1.442695
    %v180 = vpow.pop %v179
    %v181 = vmul.f32 %v174, 1.442695
    %v182 = vpow.pop %v181
    %v183 = vadd.f32 %v176, 1.0
    %v184 = vadd.f32 %v178, 1.0
    %v185 = vadd.f32 %v180, 1.0
    %v186 = vadd.f32 %v182, 1.0
    %v187 = vrcp.pop %v183
    %v188 = vmul.f32 %v183, %v187
    %v189 = vsub.f32 1.0, %v188
    %v190 = vmul.f32 %v187, %v189
    %v191 = vadd.f32 %v187, %v190
    %vm192 = vweird.f32 %v183
    %vm193 = vweird.f32 %v187
    %vm194 = vmor %vm192, %vm193
    %v195 = vsel %vm194, %v187, %v191
    %v196 = vand.u32 2147483647, %v183
    %vm197 = vcmp.eq.f32.partialorder %v196, 8.507059e+37
    %v198 = vand.u32 %v183, 2147483648
    %v199 = vor.u32 1.1754944e-38, %v198
    %v200 = vsel %vm197, %v199, %v195
    %v201 = vmul.f32 1.0, %v200
    %v202 = vrcp.pop %v184
    %v203 = vmul.f32 %v184, %v202
    %v204 = vsub.f32 1.0, %v203
    %v205 = vmul.f32 %v202, %v204
    %v206 = vadd.f32 %v202, %v205
    %vm207 = vweird.f32 %v184
    %vm208 = vweird.f32 %v202
    %vm209 = vmor %vm207, %vm208
    %v210 = vsel %vm209, %v202, %v206
    %v211 = vand.u32 2147483647, %v184
    %vm212 = vcmp.eq.f32.partialorder %v211, 8.507059e+37
    %v213 = vand.u32 %v184, 2147483648
    %v214 = vor.u32 1.1754944e-38, %v213
    %v215 = vsel %vm212, %v214, %v210
    %v216 = vmul.f32 1.0, %v215
    %v217 = vrcp.pop %v185
    %v218 = vmul.f32 %v185, %v217
    %v219 = vsub.f32 1.0, %v218
    %v220 = vmul.f32 %v217, %v219
    %v221 = vadd.f32 %v217, %v220
    %vm222 = vweird.f32 %v185
    %vm223 = vweird.f32 %v217
    %vm224 = vmor %vm222, %vm223
    %v225 = vsel %vm224, %v217, %v221
    %v226 = vand.u32 2147483647, %v185
    %vm227 = vcmp.eq.f32.partialorder %v226, 8.507059e+37
    %v228 = vand.u32 %v185, 2147483648
    %v229 = vor.u32 1.1754944e-38, %v228
    %v230 = vsel %vm227, %v229, %v225
    %v231 = vmul.f32 1.0, %v230
    %v232 = vrcp.pop %v186
    %v233 = vmul.f32 %v186, %v232
    %v234 = vsub.f32 1.0, %v233
    %v235 = vmul.f32 %v232, %v234
    %v236 = vadd.f32 %v232, %v235
    %vm237 = vweird.f32 %v186
    %vm238 = vweird.f32 %v232
    %vm239 = vmor %vm237, %vm238
    %v240 = vsel %vm239, %v232, %v236
    %v241 = vand.u32 2147483647, %v186
    %vm242 = vcmp.eq.f32.partialorder %v241, 8.507059e+37
    %v243 = vand.u32 %v186, 2147483648
    %v244 = vor.u32 1.1754944e-38, %v243
    %v245 = vsel %vm242, %v244, %v240
    %v246 = vmul.f32 1.0, %v245
    %251 = vrot.lane.b32.xlu0 %v201, 96
    %v252 = vpop.permute.xlu0 %251
    %253 = vrot.lane.b32.xlu0 %v216, 96
    %v254 = vpop.permute.xlu0 %253
    %255 = vrot.lane.b32.xlu0 %v231, 96
    %v256 = vpop.permute.xlu0 %255
    %257 = vrot.lane.b32.xlu0 %v246, 96
    %v258 = vpop.permute.xlu0 %257
    %v263 = vmul.f32 %v167, %v252
    %v264 = vmul.f32 %v168, %v254
    %v265 = vmul.f32 %v169, %v256
    %v266 = vmul.f32 %v170, %v258
    %v267 = vpack.c.bf16 %v263, %v263
    %v268 = vpack.c.bf16 %v264, %v264
    %v269 = vpack.c.bf16 %v265, %v265
    %v270 = vpack.c.bf16 %v266, %v266
    %v275 = vunpack.c.l.b16 %v267
    %v276 = vunpack.c.l.b16 %v268
    %v277 = vunpack.c.l.b16 %v269
    %v278 = vunpack.c.l.b16 %v270
    %v279 = vpack.c.b16 %v276, %v275
    %v280 = vpack.c.b16 %v278, %v277
    %v282 = vsel %vm87, %v279, %v70
    %v284 = vsel %vm87, %v280, %v72
    %v285 = vld [vmem:[%s4] sm:$0xf]
    %v286 = vld [vmem:[%s4 + $0x4] sm:$0xf]
    %v287 = vld [vmem:[%s4 + $0x8] sm:$0xf]
    %v288 = vld [vmem:[%s4 + $0xc] sm:$0xf]
    %v289 = vld [vmem:[%s4 + $0x10] sm:$0xf]
    %v290 = vld [vmem:[%s4 + $0x14] sm:$0xf]
    %v291 = vld [vmem:[%s4 + $0x18] sm:$0xf]
    %v292 = vld [vmem:[%s4 + $0x1c] sm:$0xf]
    %v293 = vld [vmem:[%s5] sm:$0x1]
    %v295 = vperm.slane %v293, 0
    %v305 = vunpack.c.l.b16 %v285
    %v306 = vunpack.c.l.b16 %v286
    %v307 = vunpack.c.l.b16 %v287
    %v308 = vunpack.c.l.b16 %v288
    %v309 = vunpack.c.l.b16 %v289
    %v310 = vunpack.c.l.b16 %v290
    %v311 = vunpack.c.l.b16 %v291
    %v312 = vunpack.c.l.b16 %v292
    %v313 = vpack.c.b16 %v306, %v305
    %v314 = vpack.c.b16 %v308, %v307
    %v315 = vpack.c.b16 %v310, %v309
    %v316 = vpack.c.b16 %v312, %v311
    %v321 = vsel %vm94, %v282, 0
    %v323 = vsel %vm94, %v284, 0
    %325 = vmatpush.bf16.msra.mxu0 0
    %326 = vmatpush.bf16.msra.mxu0 0
    %327 = vmatpush.bf16.msra.mxu0 0
    %328 = vmatpush.bf16.msra.mxu0 0
    %329 = vmatpush.bf16.msra.mxu0 %v316
    %330 = vmatpush.bf16.msra.mxu0 %v315
    %331 = vmatpush.bf16.msra.mxu0 %v314
    %332 = vmatpush.bf16.msra.mxu0 %v313
    %333 = vmatmul.bf16.gmra.mxu0 %v321
    %v334 = vpop.f32.mrf.mxu0
    %v335 = vadd.f32 %v295, %v334
    %v336 = vpop.f32.mrf.mxu0
    %v337 = vadd.f32 %v295, %v336
    %338 = vmatmul.bf16.gmra.mxu0 %v323
    %v339 = vpop.f32.mrf.mxu0
    %v340 = vadd.f32 %v295, %v339
    %v341 = vpop.f32.mrf.mxu0
    %v342 = vadd.f32 %v295, %v341
    %343 = vdwg.mxu0
    %v344 = vpack.c.bf16 %v335, %v335
    %v345 = vpack.c.bf16 %v337, %v337
    %v346 = vpack.c.bf16 %v340, %v340
    %v347 = vpack.c.bf16 %v342, %v342
    %vm348 = vcmask 519168
    %349 = vst.msk [vmem:[#allocation2] sm:$0xf] %vm348, %v344
    %350 = vst.msk [vmem:[#allocation2 + $0x4] sm:$0xf] %vm348, %v345
    %351 = vst.msk [vmem:[#allocation2 + $0x8] sm:$0xf] %vm348, %v346
    %352 = vst.msk [vmem:[#allocation2 + $0xc] sm:$0xf] %vm348, %v347
    // Predicated region
    $region26: #{tpu_custom_call.1} parent=1 // pred_check
      _
    $region27: #{tpu_custom_call.1} parent=1 // pred_check_branch
      %354 = sbr.rel (0) target = $region29
    $region28: #{tpu_custom_call.1} parent=1 // pred_region
      %356 = vsyncadd [#allocation3], 0
      %s357 = sshll.u32 [#allocation2], 4
      %s358 = int_to_ptr.vmem [resolvable:$true] %s357
      %s359 = sshll.u32 %s6, 4
      %s360 = int_to_ptr.hbm [resolvable:$true] %s359
      %365 = dma.vmem_to_hbm [thread:$0]  %s358, 256, %s360, [#allocation3], 64, 64, 4
    $region29: #{tpu_custom_call.1} parent=1 // pred_fallthru
      _
    // Predicated region
    $region30: #{tpu_custom_call.1} parent=1 // pred_check
      _
    $region31: #{tpu_custom_call.1} parent=1 // pred_check_branch
      %367 = sbr.rel (0) target = $region33
    $region32: #{tpu_custom_call.1} parent=1 // pred_region
      %369 = dma.done [#allocation3], 256
    $region33: #{tpu_custom_call.1} parent=1 // pred_fallthru
      _
    %370 = vsyncpa [#allocation3], 1

</llo_original>
